<compile_context>
chip_gen: v5e
topology: v5e:2x2
jax: 0.10.0
libtpu: 0.0.40
codegen_flags: <defaults>
</compile_context>

<pallas_src>
import jax
import jax.numpy as jnp
import numpy as np
from jax.experimental import pallas as pl
from jax.experimental.pallas import tpu as pltpu

# ---- model / problem sizes (small, consistent with the module) ----
BATCH = 2
SEQ = 8
D_MODEL = 32
D_FF = 64
N_HEAD = 4
EPS = 1e-5          # nn.LayerNorm default eps
DK = D_MODEL // N_HEAD
LANE = 128          # TPU lane width used for host-side parameter packing


def _layer_norm(x, g, b):
    mu = jnp.mean(x, axis=-1, keepdims=True)
    var = jnp.mean((x - mu) ** 2, axis=-1, keepdims=True)
    return (x - mu) * jax.lax.rsqrt(var + EPS) * g + b


def resblock_kernel(h_ref, mask_ref, w_ref, vec_ref, out_ref):
    f32, bf16 = jnp.float32, jnp.bfloat16
    D, F = D_MODEL, D_FF

    h = h_ref[...].astype(f32)          # (BS, D)   flattened batch*seq
    mask = mask_ref[...]                # (BS, BS)  additive, block-diagonal over batch

    # --- unpack packed parameter slabs (static, tile-aligned row offsets) ---
    wqkv = w_ref[0:D,           0:3 * D]   # bf16 (D, 3D)  = Wq|Wk|Wv
    wo   = w_ref[D:2 * D,       0:D]       # bf16 (D, D)
    w1   = w_ref[2 * D:3 * D,   0:F]       # bf16 (D, F)
    w2   = w_ref[3 * D:3 * D + F, 0:D]     # bf16 (F, D)
    ln1_g = vec_ref[0:1, 0:D]
    ln1_b = vec_ref[1:2, 0:D]
    bqkv  = vec_ref[2:3, 0:3 * D]
    bo    = vec_ref[3:4, 0:D]
    ln2_g = vec_ref[4:5, 0:D]
    ln2_b = vec_ref[5:6, 0:D]
    b1    = vec_ref[6:7, 0:F]
    b2    = vec_ref[7:8, 0:D]

    # --- h = self.ln(h) --- (f32 VPU math)
    hn = _layer_norm(h, ln1_g, ln1_b)

    # --- q, k, v = self.ma(h): one fused (BS,D)@(D,3D) MXU pass ---
    qkv = jnp.dot(hn.astype(bf16), wqkv, preferred_element_type=f32) + bqkv   # (BS, 3D) f32
    q, k, v = qkv[:, 0:D], qkv[:, D:2 * D], qkv[:, 2 * D:3 * D]

    # --- a = checkpoint(self.sdp, q, k, v, mask): per-head scaled dot-product attention ---
    # Each head's (BS, dk) output is placed into its own lane range of a (BS, D) concat
    # buffer via a lane mask (P_h @ V has the correct values in head h's lanes); the Wo
    # projection is then a single (BS,D)@(D,D) matmul.
    scale = np.float32(1.0 / np.sqrt(DK))
    v_b = v.astype(bf16)                                              # (BS, D)
    lane = jax.lax.broadcasted_iota(jnp.int32, (hn.shape[0], D), 1)   # (BS, D) lane index
    concat = jnp.zeros_like(hn)                                       # (BS, D) f32
    for hh in range(N_HEAD):                                          # static unroll
        sl = slice(hh * DK, (hh + 1) * DK)
        qs = q[:, sl].astype(bf16)                                    # (BS, dk)
        ks = k[:, sl].astype(bf16)                                    # (BS, dk)
        # s = q_h k_h^T / sqrt(dk) + mask   (contract last dims; no explicit transpose)
        s = jax.lax.dot_general(qs, ks, (((1,), (1,)), ((), ())),
                                preferred_element_type=f32) * scale + mask
        s = s - jnp.max(s, axis=-1, keepdims=True)
        p = jnp.exp(s)
        p = p * pl.reciprocal(jnp.sum(p, axis=-1, keepdims=True), approx=True)
        pv = jnp.dot(p.astype(bf16), v_b, preferred_element_type=f32)  # (BS, D)
        keep = (lane >= hh * DK) & (lane < (hh + 1) * DK)
        concat = concat + jnp.where(keep, pv, 0.0)
    attn = jnp.dot(concat.astype(bf16), wo, preferred_element_type=f32) + bo

    # --- a = self.norm(h, self.dp1(a)): residual add (post-LN activations) + LayerNorm ---
    a = _layer_norm(hn + attn, ln2_g, ln2_b)

    # --- b = self.dp2(checkpoint(self.ff, a)): relu(a@W1+b1)@W2+b2 ---
    ff = jnp.maximum(jnp.dot(a.astype(bf16), w1, preferred_element_type=f32) + b1, 0.0)
    b = jnp.dot(ff.astype(bf16), w2, preferred_element_type=f32) + b2

    # --- return a + b ---  (single lane-dense whole-array store)
    out_ref[...] = (a + b).astype(out_ref.dtype)


# ---------------- host-side packing ----------------
def _pad_lanes(x, width=LANE):
    return jnp.pad(x, ((0, 0), (0, width - x.shape[1])))


def pack_params(params):
    (ln1_g, ln1_b, wq, bq, wk, bk, wv, bv, wo, bo,
     ln2_g, ln2_b, w1, b1, w2, b2) = params
    wqkv = jnp.concatenate([wq, wk, wv], axis=1)     # (D, 3D)
    bqkv = jnp.concatenate([bq, bk, bv], axis=1)     # (1, 3D)
    # bf16 weight slab: rows [0:D)=Wqkv, [D:2D)=Wo, [2D:3D)=W1, [3D:3D+D_FF)=W2
    w_slab = jnp.concatenate(
        [_pad_lanes(wqkv), _pad_lanes(wo), _pad_lanes(w1), _pad_lanes(w2)],
        axis=0).astype(jnp.bfloat16)                 # (3D + D_FF, 128)
    # f32 bias/gain slab: exactly one (8,128) VMEM tile
    vec_slab = jnp.concatenate(
        [_pad_lanes(ln1_g), _pad_lanes(ln1_b), _pad_lanes(bqkv), _pad_lanes(bo),
         _pad_lanes(ln2_g), _pad_lanes(ln2_b), _pad_lanes(b1), _pad_lanes(b2)],
        axis=0).astype(jnp.float32)                  # (8, 128)
    return w_slab, vec_slab


def resblock_forward(h, mask, params):
    B, S, D = h.shape
    BS = B * S
    w_slab, vec_slab = pack_params(params)

    # Block-diagonal additive mask over the flattened (B*S) axis: diagonal blocks carry the
    # user mask, off-diagonal blocks are -1e30 so cross-batch attention is exactly zeroed.
    block_diag = jnp.kron(jnp.eye(B, dtype=jnp.float32), jnp.ones((S, S), jnp.float32))
    big_mask = jnp.where(block_diag > 0.5,
                         jnp.tile(mask.astype(jnp.float32), (B, B)),
                         jnp.float32(-1e30))

    h2d = h.reshape(BS, D)

    vmem = pl.BlockSpec(memory_space=pltpu.MemorySpace.VMEM)   # whole array, resident in VMEM
    out2d = pl.pallas_call(
        resblock_kernel,
        out_shape=jax.ShapeDtypeStruct((BS, D), h.dtype),
        in_specs=[vmem, vmem, vmem, vmem],
        out_specs=vmem,
    )(h2d, big_mask, w_slab, vec_slab)
    return out2d.reshape(B, S, D)


# ---------------- pure-JAX reference (independent check, all f32) ----------------
def resblock_reference(h, mask, params):
    (ln1_g, ln1_b, wq, bq, wk, bk, wv, bv, wo, bo,
     ln2_g, ln2_b, w1, b1, w2, b2) = params
    hn = _layer_norm(h, ln1_g, ln1_b)
    q = hn @ wq + bq
    k = hn @ wk + bk
    v = hn @ wv + bv
    B, S, D = h.shape
    qh = q.reshape(B, S, N_HEAD, DK)
    kh = k.reshape(B, S, N_HEAD, DK)
    vh = v.reshape(B, S, N_HEAD, DK)
    s = jnp.einsum("bqhd,bkhd->bhqk", qh, kh) / np.sqrt(DK) + mask[None, None]
    p = jax.nn.softmax(s, axis=-1)
    ah = jnp.einsum("bhqk,bkhd->bqhd", p, vh).reshape(B, S, D)
    attn = ah @ wo + bo
    a = _layer_norm(hn + attn, ln2_g, ln2_b)
    bb = jnp.maximum(a @ w1 + b1, 0.0) @ w2 + b2
    return a + bb


def make_params(key):
    ks = jax.random.split(key, 8)
    w = lambda k, shp: (0.02 * jax.random.normal(k, shp, jnp.float32))
    return (
        jnp.ones((1, D_MODEL), jnp.float32), jnp.zeros((1, D_MODEL), jnp.float32),   # ln1
        w(ks[0], (D_MODEL, D_MODEL)), jnp.zeros((1, D_MODEL), jnp.float32),          # Wq, bq
        w(ks[1], (D_MODEL, D_MODEL)), jnp.zeros((1, D_MODEL), jnp.float32),          # Wk, bk
        w(ks[2], (D_MODEL, D_MODEL)), jnp.zeros((1, D_MODEL), jnp.float32),          # Wv, bv
        w(ks[3], (D_MODEL, D_MODEL)), jnp.zeros((1, D_MODEL), jnp.float32),          # Wo, bo
        jnp.ones((1, D_MODEL), jnp.float32), jnp.zeros((1, D_MODEL), jnp.float32),   # ln2
        w(ks[4], (D_MODEL, D_FF)), jnp.zeros((1, D_FF), jnp.float32),                # W1, b1
        w(ks[5], (D_FF, D_MODEL)), jnp.zeros((1, D_MODEL), jnp.float32),             # W2, b2
    )


if __name__ == "__main__":
    key = jax.random.PRNGKey(0)
    k_h, k_p = jax.random.split(key)
    h = jax.random.normal(k_h, (BATCH, SEQ, D_MODEL), jnp.float32)
    # causal additive mask (broadcast over batch/heads)
    mask = jnp.where(
        jnp.tril(jnp.ones((SEQ, SEQ), jnp.bool_)), 0.0, -1e9
    ).astype(jnp.float32)
    params = make_params(k_p)

    out = resblock_forward(h, mask, params)
    out = jax.block_until_ready(out)

    ref = jax.block_until_ready(resblock_reference(h, mask, params))
    # Kernel uses bf16 matmul operands (f32 accumulation); compare to the f32 reference
    # with a tolerance that covers bf16 operand rounding.
    np.testing.assert_allclose(np.asarray(out), np.asarray(ref), atol=2e-2, rtol=2e-2)
    print("KERNEL_OK")
</pallas_src>

<mosaic_0001>
module attributes {stable_mosaic.version = 11 : i64} {
  func.func @resblock_kernel(%arg0: memref<16x32xf32, #tpu.memory_space<vmem>>, %arg1: memref<16x16xf32, #tpu.memory_space<vmem>>, %arg2: memref<160x128xbf16, #tpu.memory_space<vmem>>, %arg3: memref<8x128xf32, #tpu.memory_space<vmem>>, %arg4: memref<16x32xf32, #tpu.memory_space<vmem>>) attributes {dimension_semantics = [], scalar_prefetch = 0 : i64, scratch_operands = 0 : i64, tpu.core_type = #tpu.core_type<tc>} {
    %c0 = arith.constant 0 : index
    %c0_0 = arith.constant 0 : index
    %0 = vector.load %arg0[%c0, %c0_0] : memref<16x32xf32, #tpu.memory_space<vmem>>, vector<16x32xf32>
    %c0_1 = arith.constant 0 : index
    %c0_2 = arith.constant 0 : index
    %1 = vector.load %arg1[%c0_1, %c0_2] : memref<16x16xf32, #tpu.memory_space<vmem>>, vector<16x16xf32>
    %c0_3 = arith.constant 0 : index
    %c0_4 = arith.constant 0 : index
    %2 = vector.load %arg2[%c0_3, %c0_4] : memref<160x128xbf16, #tpu.memory_space<vmem>>, vector<32x96xbf16>
    %c32 = arith.constant 32 : index
    %c0_5 = arith.constant 0 : index
    %3 = vector.load %arg2[%c32, %c0_5] : memref<160x128xbf16, #tpu.memory_space<vmem>>, vector<32x32xbf16>
    %c64 = arith.constant 64 : index
    %c0_6 = arith.constant 0 : index
    %4 = vector.load %arg2[%c64, %c0_6] : memref<160x128xbf16, #tpu.memory_space<vmem>>, vector<32x64xbf16>
    %c96 = arith.constant 96 : index
    %c0_7 = arith.constant 0 : index
    %5 = vector.load %arg2[%c96, %c0_7] : memref<160x128xbf16, #tpu.memory_space<vmem>>, vector<64x32xbf16>
    %c0_8 = arith.constant 0 : index
    %c0_9 = arith.constant 0 : index
    %6 = vector.load %arg3[%c0_8, %c0_9] : memref<8x128xf32, #tpu.memory_space<vmem>>, vector<1x32xf32>
    %c1 = arith.constant 1 : index
    %c0_10 = arith.constant 0 : index
    %7 = vector.load %arg3[%c1, %c0_10] : memref<8x128xf32, #tpu.memory_space<vmem>>, vector<1x32xf32>
    %c2 = arith.constant 2 : index
    %c0_11 = arith.constant 0 : index
    %8 = vector.load %arg3[%c2, %c0_11] : memref<8x128xf32, #tpu.memory_space<vmem>>, vector<1x96xf32>
    %c3 = arith.constant 3 : index
    %c0_12 = arith.constant 0 : index
    %9 = vector.load %arg3[%c3, %c0_12] : memref<8x128xf32, #tpu.memory_space<vmem>>, vector<1x32xf32>
    %c4 = arith.constant 4 : index
    %c0_13 = arith.constant 0 : index
    %10 = vector.load %arg3[%c4, %c0_13] : memref<8x128xf32, #tpu.memory_space<vmem>>, vector<1x32xf32>
    %c5 = arith.constant 5 : index
    %c0_14 = arith.constant 0 : index
    %11 = vector.load %arg3[%c5, %c0_14] : memref<8x128xf32, #tpu.memory_space<vmem>>, vector<1x32xf32>
    %c6 = arith.constant 6 : index
    %c0_15 = arith.constant 0 : index
    %12 = vector.load %arg3[%c6, %c0_15] : memref<8x128xf32, #tpu.memory_space<vmem>>, vector<1x64xf32>
    %c7 = arith.constant 7 : index
    %c0_16 = arith.constant 0 : index
    %13 = vector.load %arg3[%c7, %c0_16] : memref<8x128xf32, #tpu.memory_space<vmem>>, vector<1x32xf32>
    %cst = arith.constant dense<0.000000e+00> : vector<16xf32>
    %14 = vector.multi_reduction <add>, %0, %cst [1] : vector<16x32xf32> to vector<16xf32>
    %15 = vector.shape_cast %14 : vector<16xf32> to vector<16x1xf32>
    %cst_17 = arith.constant 3.200000e+01 : f32
    %16 = vector.broadcast %cst_17 : f32 to vector<16x1xf32>
    %17 = arith.divf %15, %16 : vector<16x1xf32>
    %18 = vector.broadcast %17 : vector<16x1xf32> to vector<16x32xf32>
    %19 = arith.subf %0, %18 : vector<16x32xf32>
    %20 = arith.mulf %19, %19 : vector<16x32xf32>
    %cst_18 = arith.constant dense<0.000000e+00> : vector<16xf32>
    %21 = vector.multi_reduction <add>, %20, %cst_18 [1] : vector<16x32xf32> to vector<16xf32>
    %22 = vector.shape_cast %21 : vector<16xf32> to vector<16x1xf32>
    %cst_19 = arith.constant 3.200000e+01 : f32
    %23 = vector.broadcast %cst_19 : f32 to vector<16x1xf32>
    %24 = arith.divf %22, %23 : vector<16x1xf32>
    %25 = vector.broadcast %17 : vector<16x1xf32> to vector<16x32xf32>
    %26 = arith.subf %0, %25 : vector<16x32xf32>
    %cst_20 = arith.constant 9.99999974E-6 : f32
    %27 = vector.broadcast %cst_20 : f32 to vector<16x1xf32>
    %28 = arith.addf %24, %27 : vector<16x1xf32>
    %29 = math.rsqrt %28 : vector<16x1xf32>
    %30 = vector.broadcast %29 : vector<16x1xf32> to vector<16x32xf32>
    %31 = arith.mulf %26, %30 : vector<16x32xf32>
    %32 = vector.broadcast %6 : vector<1x32xf32> to vector<16x32xf32>
    %33 = arith.mulf %31, %32 : vector<16x32xf32>
    %34 = vector.broadcast %7 : vector<1x32xf32> to vector<16x32xf32>
    %35 = arith.addf %33, %34 : vector<16x32xf32>
    %36 = arith.truncf %35 : vector<16x32xf32> to vector<16x32xbf16>
    %cst_21 = arith.constant dense<0.000000e+00> : vector<16x96xf32>
    %37 = tpu.matmul %36, %2, %cst_21 {dimension_numbers = #tpu.dot_dimension_numbers<[1], [0], [0], [1], [0, 0, 1, 1], [], []>} : vector<16x32xbf16>, vector<32x96xbf16>, vector<16x96xf32> -> vector<16x96xf32>
    %38 = vector.broadcast %8 : vector<1x96xf32> to vector<16x96xf32>
    %39 = arith.addf %37, %38 : vector<16x96xf32>
    %40 = vector.extract_strided_slice %39 {offsets = [0, 0], sizes = [16, 32], strides = [1, 1]} : vector<16x96xf32> to vector<16x32xf32>
    %41 = vector.extract_strided_slice %39 {offsets = [0, 32], sizes = [16, 32], strides = [1, 1]} : vector<16x96xf32> to vector<16x32xf32>
    %42 = vector.extract_strided_slice %39 {offsets = [0, 64], sizes = [16, 32], strides = [1, 1]} : vector<16x96xf32> to vector<16x32xf32>
    %43 = arith.truncf %42 : vector<16x32xf32> to vector<16x32xbf16>
    %44 = tpu.iota {dimensions = array<i32: 1>} : vector<16x32xi32>
    %cst_22 = arith.constant 0.000000e+00 : f32
    %45 = vector.broadcast %cst_22 : f32 to vector<16x32xf32>
    %46 = vector.extract_strided_slice %40 {offsets = [0, 0], sizes = [16, 8], strides = [1, 1]} : vector<16x32xf32> to vector<16x8xf32>
    %47 = arith.truncf %46 : vector<16x8xf32> to vector<16x8xbf16>
    %48 = vector.extract_strided_slice %41 {offsets = [0, 0], sizes = [16, 8], strides = [1, 1]} : vector<16x32xf32> to vector<16x8xf32>
    %49 = arith.truncf %48 : vector<16x8xf32> to vector<16x8xbf16>
    %cst_23 = arith.constant dense<0.000000e+00> : vector<16x16xf32>
    %50 = tpu.matmul %47, %49, %cst_23 {dimension_numbers = #tpu.dot_dimension_numbers<[1], [1], [0], [0], [0, 0, 1, 0], [], []>} : vector<16x8xbf16>, vector<16x8xbf16>, vector<16x16xf32> -> vector<16x16xf32>
    %cst_24 = arith.constant 0.353553385 : f32
    %51 = vector.broadcast %cst_24 : f32 to vector<16x16xf32>
    %52 = arith.mulf %50, %51 : vector<16x16xf32>
    %53 = arith.addf %52, %1 : vector<16x16xf32>
    %cst_25 = arith.constant dense<0xFF800000> : vector<16xf32>
    %54 = vector.multi_reduction <maximumf>, %53, %cst_25 [1] : vector<16x16xf32> to vector<16xf32>
    %55 = vector.shape_cast %54 : vector<16xf32> to vector<16x1xf32>
    %56 = vector.broadcast %55 : vector<16x1xf32> to vector<16x16xf32>
    %57 = arith.subf %53, %56 : vector<16x16xf32>
    %58 = math.exp %57 : vector<16x16xf32>
    %cst_26 = arith.constant dense<0.000000e+00> : vector<16xf32>
    %59 = vector.multi_reduction <add>, %58, %cst_26 [1] : vector<16x16xf32> to vector<16xf32>
    %60 = vector.shape_cast %59 : vector<16xf32> to vector<16x1xf32>
    %61 = tpu.reciprocal %60 {approx = true} : vector<16x1xf32> -> vector<16x1xf32>
    %62 = vector.broadcast %61 : vector<16x1xf32> to vector<16x16xf32>
    %63 = arith.mulf %58, %62 : vector<16x16xf32>
    %64 = arith.truncf %63 : vector<16x16xf32> to vector<16x16xbf16>
    %cst_27 = arith.constant dense<0.000000e+00> : vector<16x32xf32>
    %65 = tpu.matmul %64, %43, %cst_27 {dimension_numbers = #tpu.dot_dimension_numbers<[1], [0], [0], [1], [0, 0, 1, 1], [], []>} : vector<16x16xbf16>, vector<16x32xbf16>, vector<16x32xf32> -> vector<16x32xf32>
    %c0_i32 = arith.constant 0 : i32
    %66 = vector.broadcast %c0_i32 : i32 to vector<16x32xi32>
    %67 = arith.cmpi sge, %44, %66 : vector<16x32xi32>
    %c8_i32 = arith.constant 8 : i32
    %68 = vector.broadcast %c8_i32 : i32 to vector<16x32xi32>
    %69 = arith.cmpi slt, %44, %68 : vector<16x32xi32>
    %70 = arith.andi %67, %69 : vector<16x32xi1>
    %cst_28 = arith.constant 0.000000e+00 : f32
    %71 = vector.broadcast %cst_28 : f32 to vector<16x32xf32>
    %72 = arith.select %70, %65, %71 : vector<16x32xi1>, vector<16x32xf32>
    %73 = arith.addf %45, %72 : vector<16x32xf32>
    %74 = vector.extract_strided_slice %40 {offsets = [0, 8], sizes = [16, 8], strides = [1, 1]} : vector<16x32xf32> to vector<16x8xf32>
    %75 = arith.truncf %74 : vector<16x8xf32> to vector<16x8xbf16>
    %76 = vector.extract_strided_slice %41 {offsets = [0, 8], sizes = [16, 8], strides = [1, 1]} : vector<16x32xf32> to vector<16x8xf32>
    %77 = arith.truncf %76 : vector<16x8xf32> to vector<16x8xbf16>
    %cst_29 = arith.constant dense<0.000000e+00> : vector<16x16xf32>
    %78 = tpu.matmul %75, %77, %cst_29 {dimension_numbers = #tpu.dot_dimension_numbers<[1], [1], [0], [0], [0, 0, 1, 0], [], []>} : vector<16x8xbf16>, vector<16x8xbf16>, vector<16x16xf32> -> vector<16x16xf32>
    %cst_30 = arith.constant 0.353553385 : f32
    %79 = vector.broadcast %cst_30 : f32 to vector<16x16xf32>
    %80 = arith.mulf %78, %79 : vector<16x16xf32>
    %81 = arith.addf %80, %1 : vector<16x16xf32>
    %cst_31 = arith.constant dense<0xFF800000> : vector<16xf32>
    %82 = vector.multi_reduction <maximumf>, %81, %cst_31 [1] : vector<16x16xf32> to vector<16xf32>
    %83 = vector.shape_cast %82 : vector<16xf32> to vector<16x1xf32>
    %84 = vector.broadcast %83 : vector<16x1xf32> to vector<16x16xf32>
    %85 = arith.subf %81, %84 : vector<16x16xf32>
    %86 = math.exp %85 : vector<16x16xf32>
    %cst_32 = arith.constant dense<0.000000e+00> : vector<16xf32>
    %87 = vector.multi_reduction <add>, %86, %cst_32 [1] : vector<16x16xf32> to vector<16xf32>
    %88 = vector.shape_cast %87 : vector<16xf32> to vector<16x1xf32>
    %89 = tpu.reciprocal %88 {approx = true} : vector<16x1xf32> -> vector<16x1xf32>
    %90 = vector.broadcast %89 : vector<16x1xf32> to vector<16x16xf32>
    %91 = arith.mulf %86, %90 : vector<16x16xf32>
    %92 = arith.truncf %91 : vector<16x16xf32> to vector<16x16xbf16>
    %cst_33 = arith.constant dense<0.000000e+00> : vector<16x32xf32>
    %93 = tpu.matmul %92, %43, %cst_33 {dimension_numbers = #tpu.dot_dimension_numbers<[1], [0], [0], [1], [0, 0, 1, 1], [], []>} : vector<16x16xbf16>, vector<16x32xbf16>, vector<16x32xf32> -> vector<16x32xf32>
    %c8_i32_34 = arith.constant 8 : i32
    %94 = vector.broadcast %c8_i32_34 : i32 to vector<16x32xi32>
    %95 = arith.cmpi sge, %44, %94 : vector<16x32xi32>
    %c16_i32 = arith.constant 16 : i32
    %96 = vector.broadcast %c16_i32 : i32 to vector<16x32xi32>
    %97 = arith.cmpi slt, %44, %96 : vector<16x32xi32>
    %98 = arith.andi %95, %97 : vector<16x32xi1>
    %cst_35 = arith.constant 0.000000e+00 : f32
    %99 = vector.broadcast %cst_35 : f32 to vector<16x32xf32>
    %100 = arith.select %98, %93, %99 : vector<16x32xi1>, vector<16x32xf32>
    %101 = arith.addf %73, %100 : vector<16x32xf32>
    %102 = vector.extract_strided_slice %40 {offsets = [0, 16], sizes = [16, 8], strides = [1, 1]} : vector<16x32xf32> to vector<16x8xf32>
    %103 = arith.truncf %102 : vector<16x8xf32> to vector<16x8xbf16>
    %104 = vector.extract_strided_slice %41 {offsets = [0, 16], sizes = [16, 8], strides = [1, 1]} : vector<16x32xf32> to vector<16x8xf32>
    %105 = arith.truncf %104 : vector<16x8xf32> to vector<16x8xbf16>
    %cst_36 = arith.constant dense<0.000000e+00> : vector<16x16xf32>
    %106 = tpu.matmul %103, %105, %cst_36 {dimension_numbers = #tpu.dot_dimension_numbers<[1], [1], [0], [0], [0, 0, 1, 0], [], []>} : vector<16x8xbf16>, vector<16x8xbf16>, vector<16x16xf32> -> vector<16x16xf32>
    %cst_37 = arith.constant 0.353553385 : f32
    %107 = vector.broadcast %cst_37 : f32 to vector<16x16xf32>
    %108 = arith.mulf %106, %107 : vector<16x16xf32>
    %109 = arith.addf %108, %1 : vector<16x16xf32>
    %cst_38 = arith.constant dense<0xFF800000> : vector<16xf32>
    %110 = vector.multi_reduction <maximumf>, %109, %cst_38 [1] : vector<16x16xf32> to vector<16xf32>
    %111 = vector.shape_cast %110 : vector<16xf32> to vector<16x1xf32>
    %112 = vector.broadcast %111 : vector<16x1xf32> to vector<16x16xf32>
    %113 = arith.subf %109, %112 : vector<16x16xf32>
    %114 = math.exp %113 : vector<16x16xf32>
    %cst_39 = arith.constant dense<0.000000e+00> : vector<16xf32>
    %115 = vector.multi_reduction <add>, %114, %cst_39 [1] : vector<16x16xf32> to vector<16xf32>
    %116 = vector.shape_cast %115 : vector<16xf32> to vector<16x1xf32>
    %117 = tpu.reciprocal %116 {approx = true} : vector<16x1xf32> -> vector<16x1xf32>
    %118 = vector.broadcast %117 : vector<16x1xf32> to vector<16x16xf32>
    %119 = arith.mulf %114, %118 : vector<16x16xf32>
    %120 = arith.truncf %119 : vector<16x16xf32> to vector<16x16xbf16>
    %cst_40 = arith.constant dense<0.000000e+00> : vector<16x32xf32>
    %121 = tpu.matmul %120, %43, %cst_40 {dimension_numbers = #tpu.dot_dimension_numbers<[1], [0], [0], [1], [0, 0, 1, 1], [], []>} : vector<16x16xbf16>, vector<16x32xbf16>, vector<16x32xf32> -> vector<16x32xf32>
    %c16_i32_41 = arith.constant 16 : i32
    %122 = vector.broadcast %c16_i32_41 : i32 to vector<16x32xi32>
    %123 = arith.cmpi sge, %44, %122 : vector<16x32xi32>
    %c24_i32 = arith.constant 24 : i32
    %124 = vector.broadcast %c24_i32 : i32 to vector<16x32xi32>
    %125 = arith.cmpi slt, %44, %124 : vector<16x32xi32>
    %126 = arith.andi %123, %125 : vector<16x32xi1>
    %cst_42 = arith.constant 0.000000e+00 : f32
    %127 = vector.broadcast %cst_42 : f32 to vector<16x32xf32>
    %128 = arith.select %126, %121, %127 : vector<16x32xi1>, vector<16x32xf32>
    %129 = arith.addf %101, %128 : vector<16x32xf32>
    %130 = vector.extract_strided_slice %40 {offsets = [0, 24], sizes = [16, 8], strides = [1, 1]} : vector<16x32xf32> to vector<16x8xf32>
    %131 = arith.truncf %130 : vector<16x8xf32> to vector<16x8xbf16>
    %132 = vector.extract_strided_slice %41 {offsets = [0, 24], sizes = [16, 8], strides = [1, 1]} : vector<16x32xf32> to vector<16x8xf32>
    %133 = arith.truncf %132 : vector<16x8xf32> to vector<16x8xbf16>
    %cst_43 = arith.constant dense<0.000000e+00> : vector<16x16xf32>
    %134 = tpu.matmul %131, %133, %cst_43 {dimension_numbers = #tpu.dot_dimension_numbers<[1], [1], [0], [0], [0, 0, 1, 0], [], []>} : vector<16x8xbf16>, vector<16x8xbf16>, vector<16x16xf32> -> vector<16x16xf32>
    %cst_44 = arith.constant 0.353553385 : f32
    %135 = vector.broadcast %cst_44 : f32 to vector<16x16xf32>
    %136 = arith.mulf %134, %135 : vector<16x16xf32>
    %137 = arith.addf %136, %1 : vector<16x16xf32>
    %cst_45 = arith.constant dense<0xFF800000> : vector<16xf32>
    %138 = vector.multi_reduction <maximumf>, %137, %cst_45 [1] : vector<16x16xf32> to vector<16xf32>
    %139 = vector.shape_cast %138 : vector<16xf32> to vector<16x1xf32>
    %140 = vector.broadcast %139 : vector<16x1xf32> to vector<16x16xf32>
    %141 = arith.subf %137, %140 : vector<16x16xf32>
    %142 = math.exp %141 : vector<16x16xf32>
    %cst_46 = arith.constant dense<0.000000e+00> : vector<16xf32>
    %143 = vector.multi_reduction <add>, %142, %cst_46 [1] : vector<16x16xf32> to vector<16xf32>
    %144 = vector.shape_cast %143 : vector<16xf32> to vector<16x1xf32>
    %145 = tpu.reciprocal %144 {approx = true} : vector<16x1xf32> -> vector<16x1xf32>
    %146 = vector.broadcast %145 : vector<16x1xf32> to vector<16x16xf32>
    %147 = arith.mulf %142, %146 : vector<16x16xf32>
    %148 = arith.truncf %147 : vector<16x16xf32> to vector<16x16xbf16>
    %cst_47 = arith.constant dense<0.000000e+00> : vector<16x32xf32>
    %149 = tpu.matmul %148, %43, %cst_47 {dimension_numbers = #tpu.dot_dimension_numbers<[1], [0], [0], [1], [0, 0, 1, 1], [], []>} : vector<16x16xbf16>, vector<16x32xbf16>, vector<16x32xf32> -> vector<16x32xf32>
    %c24_i32_48 = arith.constant 24 : i32
    %150 = vector.broadcast %c24_i32_48 : i32 to vector<16x32xi32>
    %151 = arith.cmpi sge, %44, %150 : vector<16x32xi32>
    %c32_i32 = arith.constant 32 : i32
    %152 = vector.broadcast %c32_i32 : i32 to vector<16x32xi32>
    %153 = arith.cmpi slt, %44, %152 : vector<16x32xi32>
    %154 = arith.andi %151, %153 : vector<16x32xi1>
    %cst_49 = arith.constant 0.000000e+00 : f32
    %155 = vector.broadcast %cst_49 : f32 to vector<16x32xf32>
    %156 = arith.select %154, %149, %155 : vector<16x32xi1>, vector<16x32xf32>
    %157 = arith.addf %129, %156 : vector<16x32xf32>
    %158 = arith.truncf %157 : vector<16x32xf32> to vector<16x32xbf16>
    %cst_50 = arith.constant dense<0.000000e+00> : vector<16x32xf32>
    %159 = tpu.matmul %158, %3, %cst_50 {dimension_numbers = #tpu.dot_dimension_numbers<[1], [0], [0], [1], [0, 0, 1, 1], [], []>} : vector<16x32xbf16>, vector<32x32xbf16>, vector<16x32xf32> -> vector<16x32xf32>
    %160 = vector.broadcast %9 : vector<1x32xf32> to vector<16x32xf32>
    %161 = arith.addf %159, %160 : vector<16x32xf32>
    %162 = arith.addf %35, %161 : vector<16x32xf32>
    %cst_51 = arith.constant dense<0.000000e+00> : vector<16xf32>
    %163 = vector.multi_reduction <add>, %162, %cst_51 [1] : vector<16x32xf32> to vector<16xf32>
    %164 = vector.shape_cast %163 : vector<16xf32> to vector<16x1xf32>
    %cst_52 = arith.constant 3.200000e+01 : f32
    %165 = vector.broadcast %cst_52 : f32 to vector<16x1xf32>
    %166 = arith.divf %164, %165 : vector<16x1xf32>
    %167 = vector.broadcast %166 : vector<16x1xf32> to vector<16x32xf32>
    %168 = arith.subf %162, %167 : vector<16x32xf32>
    %169 = arith.mulf %168, %168 : vector<16x32xf32>
    %cst_53 = arith.constant dense<0.000000e+00> : vector<16xf32>
    %170 = vector.multi_reduction <add>, %169, %cst_53 [1] : vector<16x32xf32> to vector<16xf32>
    %171 = vector.shape_cast %170 : vector<16xf32> to vector<16x1xf32>
    %cst_54 = arith.constant 3.200000e+01 : f32
    %172 = vector.broadcast %cst_54 : f32 to vector<16x1xf32>
    %173 = arith.divf %171, %172 : vector<16x1xf32>
    %174 = vector.broadcast %166 : vector<16x1xf32> to vector<16x32xf32>
    %175 = arith.subf %162, %174 : vector<16x32xf32>
    %cst_55 = arith.constant 9.99999974E-6 : f32
    %176 = vector.broadcast %cst_55 : f32 to vector<16x1xf32>
    %177 = arith.addf %173, %176 : vector<16x1xf32>
    %178 = math.rsqrt %177 : vector<16x1xf32>
    %179 = vector.broadcast %178 : vector<16x1xf32> to vector<16x32xf32>
    %180 = arith.mulf %175, %179 : vector<16x32xf32>
    %181 = vector.broadcast %10 : vector<1x32xf32> to vector<16x32xf32>
    %182 = arith.mulf %180, %181 : vector<16x32xf32>
    %183 = vector.broadcast %11 : vector<1x32xf32> to vector<16x32xf32>
    %184 = arith.addf %182, %183 : vector<16x32xf32>
    %185 = arith.truncf %184 : vector<16x32xf32> to vector<16x32xbf16>
    %cst_56 = arith.constant dense<0.000000e+00> : vector<16x64xf32>
    %186 = tpu.matmul %185, %4, %cst_56 {dimension_numbers = #tpu.dot_dimension_numbers<[1], [0], [0], [1], [0, 0, 1, 1], [], []>} : vector<16x32xbf16>, vector<32x64xbf16>, vector<16x64xf32> -> vector<16x64xf32>
    %187 = vector.broadcast %12 : vector<1x64xf32> to vector<16x64xf32>
    %188 = arith.addf %186, %187 : vector<16x64xf32>
    %cst_57 = arith.constant 0.000000e+00 : f32
    %189 = vector.broadcast %cst_57 : f32 to vector<16x64xf32>
    %190 = arith.maximumf %188, %189 : vector<16x64xf32>
    %191 = arith.truncf %190 : vector<16x64xf32> to vector<16x64xbf16>
    %cst_58 = arith.constant dense<0.000000e+00> : vector<16x32xf32>
    %192 = tpu.matmul %191, %5, %cst_58 {dimension_numbers = #tpu.dot_dimension_numbers<[1], [0], [0], [1], [0, 0, 1, 1], [], []>} : vector<16x64xbf16>, vector<64x32xbf16>, vector<16x32xf32> -> vector<16x32xf32>
    %193 = vector.broadcast %13 : vector<1x32xf32> to vector<16x32xf32>
    %194 = arith.addf %192, %193 : vector<16x32xf32>
    %195 = arith.addf %184, %194 : vector<16x32xf32>
    %c0_59 = arith.constant 0 : index
    %c0_60 = arith.constant 0 : index
    %196 = vector.load %arg4[%c0_59, %c0_60] : memref<16x32xf32, #tpu.memory_space<vmem>>, vector<16x32xf32>
    tpu.vector_store %arg4[%c0_59, %c0_60], %195 {strides = array<i32>} : memref<16x32xf32, #tpu.memory_space<vmem>>, vector<16x32xf32>,
    return
  }
}

</mosaic_0001>

<llo_original>
// kernel: tpu_custom_call.1
$region0: #{tpu_custom_call.1}
  #allocation0 [shape = 'u32[]', space=smem, size = 0x4, offset = 0x4, fixed_abs, tag = 'smem constant byte address 0x4 - core index']
  #allocation1 [shape = 'u32[72,128]{1,0:T(1,128)}', space=vmem, size = 0x9000, scoped, tag = 'internal scratch']
  %s0 = inlined_call_operand.hbm [shape: f32[16,32], index: 0, kind: input, shape index: {}]
  %s1 = inlined_call_operand.hbm [shape: f32[16,16], index: 1, kind: input, shape index: {}]
  %s2 = inlined_call_operand.hbm [shape: bf16[160,128], index: 2, kind: input, shape index: {}]
  %s3 = inlined_call_operand.hbm [shape: f32[8,128], index: 3, kind: input, shape index: {}]
  %s4 = inlined_call_operand.hbm [shape: f32[16,32], index: 4, kind: output, shape index: {}]
  %s5 = sld [smem:[#allocation0]]
  $region42: #{tpu_custom_call.1} parent=0
    _
  %s7 = ssub.s32 1, %s5
  %s8 = scalar_select 0, %s7, %s5
  $region1: #{tpu_custom_call.1} parent=0
    #allocation2 [shape = 'u8[8192]{0}', space=vmem, size = 0x2000, scoped, tag = 'input window, operand 0, single buffered']
    #allocation3 [shape = 's32[1]{0}', space=sflag, size = 0x4, scoped, tag = 'scoped memory for tpu_custom_call.1']
    #allocation4 [shape = 's32[1]{0}', space=sflag, size = 0x4, scoped, tag = 'scoped memory for tpu_custom_call.1']
    #allocation5 [shape = 'u8[8192]{0}', space=vmem, size = 0x2000, scoped, tag = 'input window, operand 1, single buffered']
    #allocation6 [shape = 's32[1]{0}', space=sflag, size = 0x4, scoped, tag = 'scoped memory for tpu_custom_call.1']
    #allocation7 [shape = 'u8[40960]{0}', space=vmem, size = 0xa000, scoped, tag = 'input window, operand 2, single buffered']
    #allocation8 [shape = 'u8[4096]{0}', space=vmem, size = 0x1000, scoped, tag = 'input window, operand 3, single buffered']
    #allocation9 [shape = 's32[1]{0}', space=sflag, size = 0x4, scoped, tag = 'scoped memory for tpu_custom_call.1']
    #allocation10 [shape = 'u8[8192]{0}', space=vmem, size = 0x2000, scoped, tag = 'output window, operand 0, single buffered']
    %9 = vsyncpa [#allocation3], 0
    %10 = vsyncpa [#allocation6], 0
    %11 = vsyncpa [#allocation9], 0
    %12 = vsyncpa [#allocation4], 0
    // Predicated region
    $region2: #{tpu_custom_call.1} parent=1 // pred_check
      _
    $region3: #{tpu_custom_call.1} parent=1 // pred_check_branch
      %14 = sbr.rel (0) target = $region5
    $region4: #{tpu_custom_call.1} parent=1 // pred_region
      %16 = vsyncadd [#allocation3], 0
      %s17 = sshll.u32 %s0, 4
      %s18 = int_to_ptr.hbm [resolvable:$true] %s17
      %s19 = sshll.u32 [#allocation2], 4
      %s20 = int_to_ptr.vmem [resolvable:$true] %s19
      %25 = dma.hbm_to_vmem [thread:$0]  %s18, 256, %s20, [#allocation3], 128, 128, 8
    $region5: #{tpu_custom_call.1} parent=1 // pred_fallthru
      _
    // Predicated region
    $region6: #{tpu_custom_call.1} parent=1 // pred_check
      _
    $region7: #{tpu_custom_call.1} parent=1 // pred_check_branch
      %27 = sbr.rel (0) target = $region9
    $region8: #{tpu_custom_call.1} parent=1 // pred_region
      %29 = vsyncadd [#allocation6], 0
      %s30 = sshll.u32 %s1, 4
      %s31 = int_to_ptr.hbm [resolvable:$true] %s30
      %s32 = sshll.u32 [#allocation5], 4
      %s33 = int_to_ptr.vmem [resolvable:$true] %s32
      %38 = dma.hbm_to_vmem [thread:$0]  %s31, 256, %s33, [#allocation6], 128, 128, 8
    $region9: #{tpu_custom_call.1} parent=1 // pred_fallthru
      _
    // Predicated region
    $region10: #{tpu_custom_call.1} parent=1 // pred_check
      _
    $region11: #{tpu_custom_call.1} parent=1 // pred_check_branch
      %40 = sbr.rel (0) target = $region13
    $region12: #{tpu_custom_call.1} parent=1 // pred_region
      %42 = vsyncadd [#allocation6], 0
      %s43 = sshll.u32 %s2, 4
      %s44 = int_to_ptr.hbm [resolvable:$true] %s43
      %s45 = sshll.u32 [#allocation7], 4
      %s46 = int_to_ptr.vmem [resolvable:$true] %s45
      %51 = dma.hbm_to_vmem [thread:$0]  %s44, 1280, %s46, [#allocation6], 64, 64, 4
    $region13: #{tpu_custom_call.1} parent=1 // pred_fallthru
      _
    // Predicated region
    $region14: #{tpu_custom_call.1} parent=1 // pred_check
      _
    $region15: #{tpu_custom_call.1} parent=1 // pred_check_branch
      %53 = sbr.rel (0) target = $region17
    $region16: #{tpu_custom_call.1} parent=1 // pred_region
      %55 = vsyncadd [#allocation9], 0
      %s57 = sshll.u32 %s3, 4
      %s58 = int_to_ptr.hbm [resolvable:$true] %s57
      %s59 = sshll.u32 [#allocation8], 4
      %s60 = int_to_ptr.vmem [resolvable:$true] %s59
      %62 = dma.hbm_to_vmem [thread:$0]  %s58, 128, %s60, [#allocation9]
    $region17: #{tpu_custom_call.1} parent=1 // pred_fallthru
      _
    // Predicated region
    $region18: #{tpu_custom_call.1} parent=1 // pred_check
      _
    $region19: #{tpu_custom_call.1} parent=1 // pred_check_branch
      %64 = sbr.rel (0) target = $region21
    $region20: #{tpu_custom_call.1} parent=1 // pred_region
      %66 = dma.done [#allocation3], 256
    $region21: #{tpu_custom_call.1} parent=1 // pred_fallthru
      _
    // Predicated region
    $region22: #{tpu_custom_call.1} parent=1 // pred_check
      _
    $region23: #{tpu_custom_call.1} parent=1 // pred_check_branch
      %68 = sbr.rel (0) target = $region25
    $region24: #{tpu_custom_call.1} parent=1 // pred_region
      %70 = dma.done [#allocation6], 256
    $region25: #{tpu_custom_call.1} parent=1 // pred_fallthru
      _
    // Predicated region
    $region26: #{tpu_custom_call.1} parent=1 // pred_check
      _
    $region27: #{tpu_custom_call.1} parent=1 // pred_check_branch
      %72 = sbr.rel (0) target = $region29
    $region28: #{tpu_custom_call.1} parent=1 // pred_region
      %74 = dma.done [#allocation6], 1280
    $region29: #{tpu_custom_call.1} parent=1 // pred_fallthru
      _
    // Predicated region
    $region30: #{tpu_custom_call.1} parent=1 // pred_check
      _
    $region31: #{tpu_custom_call.1} parent=1 // pred_check_branch
      %76 = sbr.rel (0) target = $region33
    $region32: #{tpu_custom_call.1} parent=1 // pred_region
      %78 = dma.done [#allocation9], 128
    $region33: #{tpu_custom_call.1} parent=1 // pred_fallthru
      _
    %v80 = vld [vmem:[#allocation2] sm:$0xff]
    %v81 = vld [vmem:[#allocation2 + $0x8] sm:$0xff]
    %v82 = vld [vmem:[#allocation5] sm:$0xff]
    %v83 = vld [vmem:[#allocation5 + $0x8] sm:$0xff]
    %v84 = vld [vmem:[#allocation7] sm:$0xf]
    %v85 = vld [vmem:[#allocation7 + $0x4] sm:$0xf]
    %v86 = vld [vmem:[#allocation7 + $0x8] sm:$0xf]
    %v87 = vld [vmem:[#allocation7 + $0xc] sm:$0xf]
    %v88 = vld [vmem:[#allocation7 + $0x10] sm:$0xf]
    %v89 = vld [vmem:[#allocation7 + $0x14] sm:$0xf]
    %v90 = vld [vmem:[#allocation7 + $0x18] sm:$0xf]
    %v91 = vld [vmem:[#allocation7 + $0x1c] sm:$0xf]
    %v92 = vld [vmem:[#allocation7 + $0x20] sm:$0xf]
    %v93 = vld [vmem:[#allocation7 + $0x24] sm:$0xf]
    %v94 = vld [vmem:[#allocation7 + $0x28] sm:$0xf]
    %v95 = vld [vmem:[#allocation7 + $0x2c] sm:$0xf]
    %v96 = vld [vmem:[#allocation7 + $0x30] sm:$0xf]
    %v97 = vld [vmem:[#allocation7 + $0x34] sm:$0xf]
    %v98 = vld [vmem:[#allocation7 + $0x38] sm:$0xf]
    %v99 = vld [vmem:[#allocation7 + $0x3c] sm:$0xf]
    %v100 = vld [vmem:[#allocation7 + $0x40] sm:$0xf]
    %v101 = vld [vmem:[#allocation7 + $0x44] sm:$0xf]
    %v102 = vld [vmem:[#allocation7 + $0x48] sm:$0xf]
    %v103 = vld [vmem:[#allocation7 + $0x4c] sm:$0xf]
    %v104 = vld [vmem:[#allocation8] sm:$0x1]
    %v105 = vld [vmem:[#allocation8 + $0x1] sm:$0x1]
    %v106 = vld [vmem:[#allocation8 + $0x2] sm:$0x1]
    %v107 = vld [vmem:[#allocation8 + $0x3] sm:$0x1]
    %v108 = vld [vmem:[#allocation8 + $0x4] sm:$0x1]
    %v109 = vld [vmem:[#allocation8 + $0x5] sm:$0x1]
    %v110 = vld [vmem:[#allocation8 + $0x6] sm:$0x1]
    %v111 = vld [vmem:[#allocation8 + $0x7] sm:$0x1]
    %vm112 = vcmask 261120
    %v113 = vsel %vm112, %v80, 0.0
    %114 = vadd.xlane.f32.xlu0 %v113
    %v115 = vpop.xlane.xlu0 %114
    %v116 = vsel %vm112, %v81, 0.0
    %117 = vadd.xlane.f32.xlu0 %v116
    %v118 = vpop.xlane.xlu0 %117
    %v119 = vrcp.pop 32.0
    %v120 = vmul.f32 32.0, %v119
    %v121 = vsub.f32 1.0, %v120
    %v122 = vmul.f32 %v119, %v121
    %v123 = vadd.f32 %v119, %v122
    %vm124 = vweird.f32 %v119
    %v125 = vsel %vm124, %v119, %v123
    %v126 = vmul.f32 %v115, %v125
    %v127 = vmul.f32 %v118, %v125
    %v128 = vsub.f32 %v80, %v126
    %v129 = vsub.f32 %v81, %v127
    %v130 = vmul.f32 %v128, %v128
    %v131 = vmul.f32 %v129, %v129
    %v132 = vsel %vm112, %v130, 0.0
    %133 = vadd.xlane.f32.xlu0 %v132
    %v134 = vpop.xlane.xlu0 %133
    %v135 = vsel %vm112, %v131, 0.0
    %136 = vadd.xlane.f32.xlu0 %v135
    %v137 = vpop.xlane.xlu0 %136
    %v138 = vmul.f32 %v134, %v125
    %v139 = vmul.f32 %v137, %v125
    %v140 = vadd.f32 %v138, 1e-05
    %v141 = vadd.f32 %v139, 1e-05
    %v142 = vrsqrt.pop %v140
    %v143 = vmul.f32 %v142, %v140
    %v144 = vmul.f32 %v143, %v142
    %v145 = vmul.f32 0.5, %v144
    %v146 = vsub.f32 1.5, %v145
    %v147 = vmul.f32 %v142, %v146
    %vm148 = vweird.f32 %v140
    %vm149 = vweird.f32 %v142
    %vm150 = vmor %vm148, %vm149
    %v151 = vsel %vm150, %v142, %v147
    %v152 = vrsqrt.pop %v141
    %v153 = vmul.f32 %v152, %v141
    %v154 = vmul.f32 %v153, %v152
    %v155 = vmul.f32 0.5, %v154
    %v156 = vsub.f32 1.5, %v155
    %v157 = vmul.f32 %v152, %v156
    %vm158 = vweird.f32 %v141
    %vm159 = vweird.f32 %v152
    %vm160 = vmor %vm158, %vm159
    %v161 = vsel %vm160, %v152, %v157
    %v162 = vmul.f32 %v128, %v151
    %v163 = vmul.f32 %v129, %v161
    %v164 = vperm.slane %v104, 0
    %v165 = vmul.f32 %v162, %v164
    %v166 = vmul.f32 %v163, %v164
    %v167 = vperm.slane %v105, 0
    %v168 = vadd.f32 %v165, %v167
    %v169 = vadd.f32 %v166, %v167
    %v170 = vpack.c.bf16 %v169, %v168
    %v171 = vperm.slane %v106, 0
    %v176 = vunpack.c.l.b16 %v84
    %v177 = vunpack.c.l.b16 %v85
    %v178 = vunpack.c.l.b16 %v86
    %v179 = vunpack.c.l.b16 %v87
    %v180 = vpack.c.b16 %v177, %v176
    %v181 = vpack.c.b16 %v179, %v178
    %v185 = vsel %vm112, %v170, 0
    %187 = vmatpush.bf16.msra.mxu0 0
    %188 = vmatpush.bf16.msra.mxu0 0
    %189 = vmatpush.bf16.msra.mxu0 0
    %190 = vmatpush.bf16.msra.mxu0 0
    %191 = vmatpush.bf16.msra.mxu0 0
    %192 = vmatpush.bf16.msra.mxu0 0
    %193 = vmatpush.bf16.msra.mxu0 %v181
    %194 = vmatpush.bf16.msra.mxu0 %v180
    %195 = vmatmul.bf16.gmra.mxu0 %v185
    %v196 = vpop.f32.mrf.mxu0
    %v197 = vadd.f32 %v171, %v196
    %v198 = vpop.f32.mrf.mxu0
    %v199 = vadd.f32 %v171, %v198
    %200 = vdwg.mxu0
    %v201 = vpack.c.bf16 %v199, %v197
    %v202 = vlaneseq
    %v203 = vand.u32 %v202, 127
    %205 = vrot.lane.b32.xlu0 %v201, 96
    %v206 = vpop.permute.xlu0 %205
    %vm207 = vcmask 64512
    %v209 = vsel %vm207, %v201, 0
    %v212 = vsel %vm207, %v206, 0
    %214 = vmatpush.bf16.xpose.msra.mxu0 0
    %215 = vmatpush.bf16.xpose.msra.mxu0 0
    %216 = vmatpush.bf16.xpose.msra.mxu0 0
    %217 = vmatpush.bf16.xpose.msra.mxu0 0
    %218 = vmatpush.bf16.xpose.msra.mxu0 0
    %219 = vmatpush.bf16.xpose.msra.mxu0 0
    %220 = vmatpush.bf16.xpose.msra.mxu0 0
    %221 = vmatpush.bf16.xpose.msra.mxu0 %v212
    %222 = vmatmul.bf16.gmra.mxu0 %v209
    %v223 = vpop.f32.mrf.mxu0
    %v224 = vadd.f32 0.0, %v223
    %v225 = vpop.f32.mrf.mxu0
    %v226 = vadd.f32 0.0, %v225
    %227 = vdwg.mxu0
    %v228 = vmul.f32 %v224, 0.35355338
    %v229 = vmul.f32 %v226, 0.35355338
    %v230 = vadd.f32 %v228, %v82
    %v231 = vadd.f32 %v229, %v83
    %vm232 = vcmask 130048
    %v233 = vsel %vm232, %v230, -inf
    %234 = vmax.xlane.f32.xlu0 %v233
    %v235 = vpop.xlane.xlu0 %234
    %v236 = vsel %vm232, %v231, -inf
    %237 = vmax.xlane.f32.xlu0 %v236
    %v238 = vpop.xlane.xlu0 %237
    %v239 = vsub.f32 %v230, %v235
    %v240 = vsub.f32 %v231, %v238
    %v241 = vmul.f32 %v239, 1.442695
    %v242 = vpow.pop %v241
    %v243 = vmul.f32 %v240, 1.442695
    %v244 = vpow.pop %v243
    %v245 = vsel %vm232, %v242, 0.0
    %246 = vadd.xlane.f32.xlu0 %v245
    %v247 = vpop.xlane.xlu0 %246
    %v248 = vsel %vm232, %v244, 0.0
    %249 = vadd.xlane.f32.xlu0 %v248
    %v250 = vpop.xlane.xlu0 %249
    %v251 = vrcp.pop %v247
    %v252 = vrcp.pop %v250
    %v253 = vmul.f32 %v242, %v251
    %v254 = vmul.f32 %v244, %v252
    %v255 = vpack.c.bf16 %v254, %v253
    %256 = vrot.lane.b32.xlu0 %v201, 64
    %v257 = vpop.permute.xlu0 %256
    %v260 = vsel %vm232, %v255, 0
    %262 = vmatpush.bf16.msra.mxu0 0
    %263 = vmatpush.bf16.msra.mxu0 0
    %264 = vmatpush.bf16.msra.mxu0 0
    %265 = vmatpush.bf16.msra.mxu0 0
    %266 = vmatpush.bf16.msra.mxu0 0
    %267 = vmatpush.bf16.msra.mxu0 0
    %268 = vmatpush.bf16.msra.mxu0 0
    %269 = vmatpush.bf16.msra.mxu0 %v257
    %270 = vmatmul.bf16.gmra.mxu0 %v260
    %v271 = vpop.f32.mrf.mxu0
    %v272 = vadd.f32 0.0, %v271
    %v273 = vpop.f32.mrf.mxu0
    %v274 = vadd.f32 0.0, %v273
    %275 = vdwg.mxu0
    %vm276 = vcmp.ge.s32.totalorder %v203, 0
    %vm277 = vcmp.lt.s32.totalorder %v203, 8
    %vm278 = vmand %vm276, %vm277
    %v279 = vsel %vm278, %v272, 0.0
    %v280 = vsel %vm278, %v274, 0.0
    %v281 = vadd.f32 %v279, 0.0
    %v282 = vadd.f32 %v280, 0.0
    %283 = vrot.lane.b32.xlu0 %v201, 120
    %v284 = vpop.permute.xlu0 %283
    %285 = vrot.lane.b32.xlu0 %v201, 88
    %v286 = vpop.permute.xlu0 %285
    %v288 = vsel %vm207, %v284, 0
    %v291 = vsel %vm207, %v286, 0
    %293 = vmatpush.bf16.xpose.msra.mxu0 0
    %294 = vmatpush.bf16.xpose.msra.mxu0 0
    %295 = vmatpush.bf16.xpose.msra.mxu0 0
    %296 = vmatpush.bf16.xpose.msra.mxu0 0
    %297 = vmatpush.bf16.xpose.msra.mxu0 0
    %298 = vmatpush.bf16.xpose.msra.mxu0 0
    %299 = vmatpush.bf16.xpose.msra.mxu0 0
    %300 = vmatpush.bf16.xpose.msra.mxu0 %v291
    %301 = vmatmul.bf16.gmra.mxu0 %v288
    %v302 = vpop.f32.mrf.mxu0
    %v303 = vadd.f32 0.0, %v302
    %v304 = vpop.f32.mrf.mxu0
    %v305 = vadd.f32 0.0, %v304
    %306 = vdwg.mxu0
    %v307 = vmul.f32 %v303, 0.35355338
    %v308 = vmul.f32 %v305, 0.35355338
    %v309 = vadd.f32 %v307, %v82
    %v310 = vadd.f32 %v308, %v83
    %v311 = vsel %vm232, %v309, -inf
    %312 = vmax.xlane.f32.xlu0 %v311
    %v313 = vpop.xlane.xlu0 %312
    %v314 = vsel %vm232, %v310, -inf
    %315 = vmax.xlane.f32.xlu0 %v314
    %v316 = vpop.xlane.xlu0 %315
    %v317 = vsub.f32 %v309, %v313
    %v318 = vsub.f32 %v310, %v316
    %v319 = vmul.f32 %v317, 1.442695
    %v320 = vpow.pop %v319
    %v321 = vmul.f32 %v318, 1.442695
    %v322 = vpow.pop %v321
    %v323 = vsel %vm232, %v320, 0.0
    %324 = vadd.xlane.f32.xlu0 %v323
    %v325 = vpop.xlane.xlu0 %324
    %v326 = vsel %vm232, %v322, 0.0
    %327 = vadd.xlane.f32.xlu0 %v326
    %v328 = vpop.xlane.xlu0 %327
    %v329 = vrcp.pop %v325
    %v330 = vrcp.pop %v328
    %v331 = vmul.f32 %v320, %v329
    %v332 = vmul.f32 %v322, %v330
    %v333 = vpack.c.bf16 %v332, %v331
    %v335 = vsel %vm232, %v333, 0
    %337 = vmatpush.bf16.msra.mxu0 0
    %338 = vmatpush.bf16.msra.mxu0 0
    %339 = vmatpush.bf16.msra.mxu0 0
    %340 = vmatpush.bf16.msra.mxu0 0
    %341 = vmatpush.bf16.msra.mxu0 0
    %342 = vmatpush.bf16.msra.mxu0 0
    %343 = vmatpush.bf16.msra.mxu0 0
    %344 = vmatpush.bf16.msra.mxu0 %v257
    %345 = vmatmul.bf16.gmra.mxu0 %v335
    %v346 = vpop.f32.mrf.mxu0
    %v347 = vadd.f32 0.0, %v346
    %v348 = vpop.f32.mrf.mxu0
    %v349 = vadd.f32 0.0, %v348
    %350 = vdwg.mxu0
    %vm351 = vcmp.ge.s32.totalorder %v203, 8
    %vm352 = vcmp.lt.s32.totalorder %v203, 16
    %vm353 = vmand %vm351, %vm352
    %v354 = vsel %vm353, %v347, 0.0
    %v355 = vsel %vm353, %v349, 0.0
    %v356 = vadd.f32 %v281, %v354
    %v357 = vadd.f32 %v282, %v355
    %358 = vrot.lane.b32.xlu0 %v201, 112
    %v359 = vpop.permute.xlu0 %358
    %360 = vrot.lane.b32.xlu0 %v201, 80
    %v361 = vpop.permute.xlu0 %360
    %v363 = vsel %vm207, %v359, 0
    %v366 = vsel %vm207, %v361, 0
    %368 = vmatpush.bf16.xpose.msra.mxu0 0
    %369 = vmatpush.bf16.xpose.msra.mxu0 0
    %370 = vmatpush.bf16.xpose.msra.mxu0 0
    %371 = vmatpush.bf16.xpose.msra.mxu0 0
    %372 = vmatpush.bf16.xpose.msra.mxu0 0
    %373 = vmatpush.bf16.xpose.msra.mxu0 0
    %374 = vmatpush.bf16.xpose.msra.mxu0 0
    %375 = vmatpush.bf16.xpose.msra.mxu0 %v366
    %376 = vmatmul.bf16.gmra.mxu0 %v363
    %v377 = vpop.f32.mrf.mxu0
    %v378 = vadd.f32 0.0, %v377
    %v379 = vpop.f32.mrf.mxu0
    %v380 = vadd.f32 0.0, %v379
    %381 = vdwg.mxu0
    %v382 = vmul.f32 %v378, 0.35355338
    %v383 = vmul.f32 %v380, 0.35355338
    %v384 = vadd.f32 %v382, %v82
    %v385 = vadd.f32 %v383, %v83
    %v386 = vsel %vm232, %v384, -inf
    %387 = vmax.xlane.f32.xlu0 %v386
    %v388 = vpop.xlane.xlu0 %387
    %v389 = vsel %vm232, %v385, -inf
    %390 = vmax.xlane.f32.xlu0 %v389
    %v391 = vpop.xlane.xlu0 %390
    %v392 = vsub.f32 %v384, %v388
    %v393 = vsub.f32 %v385, %v391
    %v394 = vmul.f32 %v392, 1.442695
    %v395 = vpow.pop %v394
    %v396 = vmul.f32 %v393, 1.442695
    %v397 = vpow.pop %v396
    %v398 = vsel %vm232, %v395, 0.0
    %399 = vadd.xlane.f32.xlu0 %v398
    %v400 = vpop.xlane.xlu0 %399
    %v401 = vsel %vm232, %v397, 0.0
    %402 = vadd.xlane.f32.xlu0 %v401
    %v403 = vpop.xlane.xlu0 %402
    %v404 = vrcp.pop %v400
    %v405 = vrcp.pop %v403
    %v406 = vmul.f32 %v395, %v404
    %v407 = vmul.f32 %v397, %v405
    %v408 = vpack.c.bf16 %v407, %v406
    %v410 = vsel %vm232, %v408, 0
    %412 = vmatpush.bf16.msra.mxu0 0
    %413 = vmatpush.bf16.msra.mxu0 0
    %414 = vmatpush.bf16.msra.mxu0 0
    %415 = vmatpush.bf16.msra.mxu0 0
    %416 = vmatpush.bf16.msra.mxu0 0
    %417 = vmatpush.bf16.msra.mxu0 0
    %418 = vmatpush.bf16.msra.mxu0 0
    %419 = vmatpush.bf16.msra.mxu0 %v257
    %420 = vmatmul.bf16.gmra.mxu0 %v410
    %v421 = vpop.f32.mrf.mxu0
    %v422 = vadd.f32 0.0, %v421
    %v423 = vpop.f32.mrf.mxu0
    %v424 = vadd.f32 0.0, %v423
    %425 = vdwg.mxu0
    %vm426 = vcmp.ge.s32.totalorder %v203, 16
    %vm427 = vcmp.lt.s32.totalorder %v203, 24
    %vm428 = vmand %vm426, %vm427
    %v429 = vsel %vm428, %v422, 0.0
    %v430 = vsel %vm428, %v424, 0.0
    %v431 = vadd.f32 %v356, %v429
    %v432 = vadd.f32 %v357, %v430
    %433 = vrot.lane.b32.xlu0 %v201, 104
    %v434 = vpop.permute.xlu0 %433
    %435 = vrot.lane.b32.xlu0 %v201, 72
    %v436 = vpop.permute.xlu0 %435
    %v438 = vsel %vm207, %v434, 0
    %v441 = vsel %vm207, %v436, 0
    %443 = vmatpush.bf16.xpose.msra.mxu0 0
    %444 = vmatpush.bf16.xpose.msra.mxu0 0
    %445 = vmatpush.bf16.xpose.msra.mxu0 0
    %446 = vmatpush.bf16.xpose.msra.mxu0 0
    %447 = vmatpush.bf16.xpose.msra.mxu0 0
    %448 = vmatpush.bf16.xpose.msra.mxu0 0
    %449 = vmatpush.bf16.xpose.msra.mxu0 0
    %450 = vmatpush.bf16.xpose.msra.mxu0 %v441
    %451 = vmatmul.bf16.gmra.mxu0 %v438
    %v452 = vpop.f32.mrf.mxu0
    %v453 = vadd.f32 0.0, %v452
    %v454 = vpop.f32.mrf.mxu0
    %v455 = vadd.f32 0.0, %v454
    %456 = vdwg.mxu0
    %v457 = vmul.f32 %v453, 0.35355338
    %v458 = vmul.f32 %v455, 0.35355338
    %v459 = vadd.f32 %v457, %v82
    %v460 = vadd.f32 %v458, %v83
    %v461 = vsel %vm232, %v459, -inf
    %462 = vmax.xlane.f32.xlu0 %v461
    %v463 = vpop.xlane.xlu0 %462
    %v464 = vsel %vm232, %v460, -inf
    %465 = vmax.xlane.f32.xlu0 %v464
    %v466 = vpop.xlane.xlu0 %465
    %v467 = vsub.f32 %v459, %v463
    %v468 = vsub.f32 %v460, %v466
    %v469 = vmul.f32 %v467, 1.442695
    %v470 = vpow.pop %v469
    %v471 = vmul.f32 %v468, 1.442695
    %v472 = vpow.pop %v471
    %v473 = vsel %vm232, %v470, 0.0
    %474 = vadd.xlane.f32.xlu0 %v473
    %v475 = vpop.xlane.xlu0 %474
    %v476 = vsel %vm232, %v472, 0.0
    %477 = vadd.xlane.f32.xlu0 %v476
    %v478 = vpop.xlane.xlu0 %477
    %v479 = vrcp.pop %v475
    %v480 = vrcp.pop %v478
    %v481 = vmul.f32 %v470, %v479
    %v482 = vmul.f32 %v472, %v480
    %v483 = vpack.c.bf16 %v482, %v481
    %v485 = vsel %vm232, %v483, 0
    %487 = vmatpush.bf16.msra.mxu0 0
    %488 = vmatpush.bf16.msra.mxu0 0
    %489 = vmatpush.bf16.msra.mxu0 0
    %490 = vmatpush.bf16.msra.mxu0 0
    %491 = vmatpush.bf16.msra.mxu0 0
    %492 = vmatpush.bf16.msra.mxu0 0
    %493 = vmatpush.bf16.msra.mxu0 0
    %494 = vmatpush.bf16.msra.mxu0 %v257
    %495 = vmatmul.bf16.gmra.mxu0 %v485
    %v496 = vpop.f32.mrf.mxu0
    %v497 = vadd.f32 0.0, %v496
    %v498 = vpop.f32.mrf.mxu0
    %v499 = vadd.f32 0.0, %v498
    %500 = vdwg.mxu0
    %vm501 = vcmp.ge.s32.totalorder %v203, 24
    %vm502 = vcmp.lt.s32.totalorder %v203, 32
    %vm503 = vmand %vm501, %vm502
    %v504 = vsel %vm503, %v497, 0.0
    %v505 = vsel %vm503, %v499, 0.0
    %v506 = vadd.f32 %v431, %v504
    %v507 = vadd.f32 %v432, %v505
    %v508 = vpack.c.bf16 %v507, %v506
    %v509 = vperm.slane %v107, 0
    %v514 = vunpack.c.l.b16 %v88
    %v515 = vunpack.c.l.b16 %v89
    %v516 = vunpack.c.l.b16 %v90
    %v517 = vunpack.c.l.b16 %v91
    %v518 = vpack.c.b16 %v515, %v514
    %v519 = vpack.c.b16 %v517, %v516
    %v523 = vsel %vm112, %v508, 0
    %525 = vmatpush.bf16.msra.mxu0 0
    %526 = vmatpush.bf16.msra.mxu0 0
    %527 = vmatpush.bf16.msra.mxu0 0
    %528 = vmatpush.bf16.msra.mxu0 0
    %529 = vmatpush.bf16.msra.mxu0 0
    %530 = vmatpush.bf16.msra.mxu0 0
    %531 = vmatpush.bf16.msra.mxu0 %v519
    %532 = vmatpush.bf16.msra.mxu0 %v518
    %533 = vmatmul.bf16.gmra.mxu0 %v523
    %v534 = vpop.f32.mrf.mxu0
    %v535 = vadd.f32 %v509, %v534
    %v536 = vpop.f32.mrf.mxu0
    %v537 = vadd.f32 %v509, %v536
    %538 = vdwg.mxu0
    %v539 = vadd.f32 %v168, %v535
    %v540 = vadd.f32 %v169, %v537
    %v541 = vsel %vm112, %v539, 0.0
    %542 = vadd.xlane.f32.xlu0 %v541
    %v543 = vpop.xlane.xlu0 %542
    %v544 = vsel %vm112, %v540, 0.0
    %545 = vadd.xlane.f32.xlu0 %v544
    %v546 = vpop.xlane.xlu0 %545
    %v547 = vmul.f32 %v543, %v125
    %v548 = vmul.f32 %v546, %v125
    %v549 = vsub.f32 %v539, %v547
    %v550 = vsub.f32 %v540, %v548
    %v551 = vmul.f32 %v549, %v549
    %v552 = vmul.f32 %v550, %v550
    %v553 = vsel %vm112, %v551, 0.0
    %554 = vadd.xlane.f32.xlu0 %v553
    %v555 = vpop.xlane.xlu0 %554
    %v556 = vsel %vm112, %v552, 0.0
    %557 = vadd.xlane.f32.xlu0 %v556
    %v558 = vpop.xlane.xlu0 %557
    %v559 = vmul.f32 %v555, %v125
    %v560 = vmul.f32 %v558, %v125
    %v561 = vadd.f32 %v559, 1e-05
    %v562 = vadd.f32 %v560, 1e-05
    %v563 = vrsqrt.pop %v561
    %v564 = vmul.f32 %v563, %v561
    %v565 = vmul.f32 %v564, %v563
    %v566 = vmul.f32 0.5, %v565
    %v567 = vsub.f32 1.5, %v566
    %v568 = vmul.f32 %v563, %v567
    %vm569 = vweird.f32 %v561
    %vm570 = vweird.f32 %v563
    %vm571 = vmor %vm569, %vm570
    %v572 = vsel %vm571, %v563, %v568
    %v573 = vrsqrt.pop %v562
    %v574 = vmul.f32 %v573, %v562
    %v575 = vmul.f32 %v574, %v573
    %v576 = vmul.f32 0.5, %v575
    %v577 = vsub.f32 1.5, %v576
    %v578 = vmul.f32 %v573, %v577
    %vm579 = vweird.f32 %v562
    %vm580 = vweird.f32 %v573
    %vm581 = vmor %vm579, %vm580
    %v582 = vsel %vm581, %v573, %v578
    %v583 = vmul.f32 %v549, %v572
    %v584 = vmul.f32 %v550, %v582
    %v585 = vperm.slane %v108, 0
    %v586 = vmul.f32 %v583, %v585
    %v587 = vmul.f32 %v584, %v585
    %v588 = vperm.slane %v109, 0
    %v589 = vadd.f32 %v586, %v588
    %v590 = vadd.f32 %v587, %v588
    %v591 = vpack.c.bf16 %v590, %v589
    %v592 = vperm.slane %v110, 0
    %v597 = vunpack.c.l.b16 %v92
    %v598 = vunpack.c.l.b16 %v93
    %v599 = vunpack.c.l.b16 %v94
    %v600 = vunpack.c.l.b16 %v95
    %v601 = vpack.c.b16 %v598, %v597
    %v602 = vpack.c.b16 %v600, %v599
    %v606 = vsel %vm112, %v591, 0
    %608 = vmatpush.bf16.msra.mxu0 0
    %609 = vmatpush.bf16.msra.mxu0 0
    %610 = vmatpush.bf16.msra.mxu0 0
    %611 = vmatpush.bf16.msra.mxu0 0
    %612 = vmatpush.bf16.msra.mxu0 0
    %613 = vmatpush.bf16.msra.mxu0 0
    %614 = vmatpush.bf16.msra.mxu0 %v602
    %615 = vmatpush.bf16.msra.mxu0 %v601
    %616 = vmatmul.bf16.gmra.mxu0 %v606
    %v617 = vpop.f32.mrf.mxu0
    %v618 = vadd.f32 %v592, %v617
    %v619 = vpop.f32.mrf.mxu0
    %v620 = vadd.f32 %v592, %v619
    %621 = vdwg.mxu0
    %v622 = vmax.f32 %v618, 0.0
    %v623 = vmax.f32 %v620, 0.0
    %v624 = vpack.c.bf16 %v623, %v622
    %v625 = vperm.slane %v111, 0
    %v634 = vunpack.c.l.b16 %v96
    %v635 = vunpack.c.l.b16 %v97
    %v636 = vunpack.c.l.b16 %v98
    %v637 = vunpack.c.l.b16 %v99
    %v638 = vunpack.c.l.b16 %v100
    %v639 = vunpack.c.l.b16 %v101
    %v640 = vunpack.c.l.b16 %v102
    %v641 = vunpack.c.l.b16 %v103
    %v642 = vpack.c.b16 %v635, %v634
    %v643 = vpack.c.b16 %v637, %v636
    %v644 = vpack.c.b16 %v639, %v638
    %v645 = vpack.c.b16 %v641, %v640
    %vm650 = vcmask 523264
    %v652 = vsel %vm650, %v624, 0
    %654 = vmatpush.bf16.msra.mxu0 0
    %655 = vmatpush.bf16.msra.mxu0 0
    %656 = vmatpush.bf16.msra.mxu0 0
    %657 = vmatpush.bf16.msra.mxu0 0
    %658 = vmatpush.bf16.msra.mxu0 %v645
    %659 = vmatpush.bf16.msra.mxu0 %v644
    %660 = vmatpush.bf16.msra.mxu0 %v643
    %661 = vmatpush.bf16.msra.mxu0 %v642
    %662 = vmatmul.bf16.gmra.mxu0 %v652
    %v663 = vpop.f32.mrf.mxu0
    %v664 = vadd.f32 %v625, %v663
    %v665 = vpop.f32.mrf.mxu0
    %v666 = vadd.f32 %v625, %v665
    %667 = vdwg.mxu0
    %v668 = vadd.f32 %v589, %v664
    %v669 = vadd.f32 %v590, %v666
    %670 = vst.msk [vmem:[#allocation10] sm:$0xff] %vm112, %v668
    %671 = vst.msk [vmem:[#allocation10 + $0x8] sm:$0xff] %vm112, %v669
    // Predicated region
    $region34: #{tpu_custom_call.1} parent=1 // pred_check
      _
    $region35: #{tpu_custom_call.1} parent=1 // pred_check_branch
      %673 = sbr.rel (0) target = $region37
    $region36: #{tpu_custom_call.1} parent=1 // pred_region
      %675 = vsyncadd [#allocation4], 0
      %s676 = sshll.u32 [#allocation10], 4
      %s677 = int_to_ptr.vmem [resolvable:$true] %s676
      %s678 = sshll.u32 %s4, 4
      %s679 = int_to_ptr.hbm [resolvable:$true] %s678
      %684 = dma.vmem_to_hbm [thread:$0]  %s677, 256, %s679, [#allocation4], 128, 128, 8
    $region37: #{tpu_custom_call.1} parent=1 // pred_fallthru
      _
    // Predicated region
    $region38: #{tpu_custom_call.1} parent=1 // pred_check
      _
    $region39: #{tpu_custom_call.1} parent=1 // pred_check_branch
      %686 = sbr.rel (0) target = $region41
    $region40: #{tpu_custom_call.1} parent=1 // pred_region
      %688 = dma.done [#allocation4], 256
    $region41: #{tpu_custom_call.1} parent=1 // pred_fallthru
      _
    %689 = vsyncpa [#allocation3], 1
    %690 = vsyncpa [#allocation6], 1
    %691 = vsyncpa [#allocation9], 1
    %692 = vsyncpa [#allocation4], 1

</llo_original>
